<compile_context>
chip_gen: v7x
topology: tpu7x:2x2x1
jax: 0.10.0
libtpu: 0.0.40
codegen_flags: <defaults>
</compile_context>

<pallas_src>
import functools

import jax
import jax.numpy as jnp
from jax.experimental import pallas as pl
from jax.experimental.pallas import tpu as pltpu


def _round_up(n: int, m: int) -> int:
    return ((n + m - 1) // m) * m


def _cdiv(n: int, m: int) -> int:
    return (n + m - 1) // m


def _mlp_kernel(x_ref, w_in_ref, b_in_ref, w_out_ref, b_out_ref, o_ref, *, use_bf16):
    """One (batch_tile, hidden_tile) step of out = tanh(x@W1 + b1) @ W2 + b2.

    Grid = (batch tiles, hidden tiles). The output block index is constant
    along the hidden axis, so o_ref stays VMEM-resident and is used as the
    f32 accumulator (init at k==0, bias-finalize at the last k).
    """
    k = pl.program_id(1)

    @pl.when(k == 0)
    def _init():
        o_ref[...] = jnp.zeros_like(o_ref)

    x = x_ref[...]
    if use_bf16:
        # Cast on the VPU, under the MXU; x stays f32 in HBM (no wrapper pad/cast).
        x = x.astype(jnp.bfloat16)
    h = jnp.dot(x, w_in_ref[...], preferred_element_type=jnp.float32)
    h = jnp.tanh(h + b_in_ref[...])            # bias-add + tanh in f32 (EUP)
    if use_bf16:
        h = h.astype(jnp.bfloat16)
    o_ref[...] += jnp.dot(h, w_out_ref[...], preferred_element_type=jnp.float32)

    @pl.when(k == pl.num_programs(1) - 1)
    def _finalize():
        o_ref[...] += b_out_ref[...]


def mlp_forward(x, w_in, b_in, w_out, b_out, *,
                batch_tile=512, hidden_tile=None, use_bf16_matmul=False):
    """out = tanh(x @ w_in + b_in) @ w_out + b_out.

    x:     [B, in]      float32 (kept f32 in HBM; cast in-kernel if bf16 path)
    w_in:  [in, hidden]  (transposed vs. torch.nn.Linear.weight)
    b_in:  [hidden] or [1, hidden]
    w_out: [hidden, out]
    b_out: [out] or [1, out]

    use_bf16_matmul: explicit precision choice. False (default) keeps the f32
    semantics of the PyTorch module. True casts MXU inputs to bf16 (weights
    cast once here — ideally hoisted out of the per-call path by the caller;
    activations cast in-kernel) with f32 accumulation.
    """
    B, in_size = x.shape
    hidden = w_in.shape[1]
    out_size = w_out.shape[1]

    b_in = jnp.reshape(b_in, (1, hidden)).astype(jnp.float32)
    b_out = jnp.reshape(b_out, (1, out_size)).astype(jnp.float32)
    if use_bf16_matmul:
        w_in = w_in.astype(jnp.bfloat16)
        w_out = w_out.astype(jnp.bfloat16)
    wd = jnp.dtype(w_in.dtype).itemsize

    # ---- batch tiling: ragged (no over-padding), >=2 steps when B >= 32 ------
    if B >= 32:
        tb = min(batch_tile, _round_up(_cdiv(B, 2), 16))
    else:
        tb = _round_up(B, 8)
    tb = max(8, min(tb, _round_up(B, 8)))
    grid_b = _cdiv(B, tb)          # Pallas masks the ragged last batch tile.

    # ---- generation-aware VMEM budget ----------------------------------------
    try:
        vmem_cap = int(pltpu.get_tpu_info().vmem_capacity_bytes)
    except Exception:
        vmem_cap = 64 << 20        # conservative (v7x per-core VMEM)
    budget = int(0.9 * vmem_cap)

    def _weight_slab_bytes(th):    # one hidden-slice of W1/W2 + b1 in VMEM
        return (in_size * th + th * out_size) * wd + th * 4

    io_bytes = 2 * tb * in_size * 4 + 2 * tb * out_size * 4 + out_size * 4

    def _fits(th, nbuf):
        h_bytes = tb * th * (6 if use_bf16_matmul else 4)   # h (+ bf16 copy)
        return nbuf * _weight_slab_bytes(th) + h_bytes + io_bytes + (8 << 20) <= budget

    # ---- hidden tiling: resident weights if they fit, else K-tiled fallback --
    if hidden_tile is None:
        if _fits(hidden, 1):
            hidden_tile = hidden
        else:
            hidden_tile = hidden
            for d in range(128, hidden, 128):   # largest 128-multiple divisor that fits
                if hidden % d == 0 and _fits(d, 2):
                    hidden_tile = d
            # TODO(synk): if no 128-multiple divisor fits, this still attempts full
            # residency; a ragged hidden tile would need zero-padded weights.
    assert hidden % hidden_tile == 0, "hidden_tile must divide hidden"
    num_k = hidden // hidden_tile

    # Single-buffer the constant-index weight/bias operands only when the 2x
    # VMEM saving matters (keeps tiny shapes on the default pipeline).
    resident = num_k == 1
    single_buf = resident and (_weight_slab_bytes(hidden) + out_size * 4) > (4 << 20)

    def _spec(shape, index_map, single):
        if single:
            return pl.BlockSpec(shape, index_map, pipeline_mode=pl.Buffered(1))
        return pl.BlockSpec(shape, index_map)

    in_specs = [
        # x: varies per batch tile only; constant across k so it stays resident
        # within a batch tile's hidden sweep.
        # (Optional further tweak: pipeline_mode=pl.Buffered(3) for small hidden.)
        pl.BlockSpec((tb, in_size), lambda i, k: (i, 0)),
        _spec((in_size, hidden_tile), lambda i, k: (0, k), single_buf),
        _spec((1, hidden_tile), lambda i, k: (0, k), single_buf),
        _spec((hidden_tile, out_size), lambda i, k: (k, 0), single_buf),
        _spec((1, out_size), lambda i, k: (0, 0), single_buf),
    ]
    out_spec = pl.BlockSpec((tb, out_size), lambda i, k: (i, 0))

    nbuf_w = 1 if single_buf else 2
    need = (nbuf_w * _weight_slab_bytes(hidden_tile) + 2 * out_size * 4
            + 2 * tb * in_size * 4 + 2 * tb * out_size * 4
            + tb * hidden_tile * (6 if use_bf16_matmul else 4))
    vmem_limit = int(min(budget, max(32 << 20, 2 * need + (8 << 20))))

    cost = pl.CostEstimate(
        flops=2 * B * (in_size * hidden + hidden * out_size),
        transcendentals=B * hidden,
        bytes_accessed=(x.size * 4 + w_in.size * wd + w_out.size * wd
                        + (hidden + out_size) * 4 + B * out_size * 4),
    )

    out = pl.pallas_call(
        functools.partial(_mlp_kernel, use_bf16=use_bf16_matmul),
        out_shape=jax.ShapeDtypeStruct((B, out_size), jnp.float32),
        grid_spec=pltpu.PrefetchScalarGridSpec(
            num_scalar_prefetch=0,
            grid=(grid_b, num_k),           # reduction (hidden) axis last
            in_specs=in_specs,
            out_specs=out_spec,
        ),
        compiler_params=pltpu.CompilerParams(
            dimension_semantics=("parallel", "arbitrary"),
            vmem_limit_bytes=vmem_limit,
        ),
        cost_estimate=cost,
    )(x, w_in, b_in, w_out, b_out)

    return out.astype(x.dtype)


if __name__ == "__main__":
    # Small shapes consistent with the module.
    batch = 8
    input_size = 32
    hidden_dim = 64
    output_size = 16
    n_layers = 2   # unused by the reference module's __init__-defined layers

    key = jax.random.PRNGKey(0)
    kx, kw1, kb1, kw2, kb2 = jax.random.split(key, 5)

    x = jax.random.normal(kx, (batch, input_size), dtype=jnp.float32)

    # PyTorch Linear stores [out, in]; we store [in, out].
    bound1 = 1.0 / (input_size ** 0.5)
    w_in = jax.random.uniform(kw1, (input_size, hidden_dim), jnp.float32, -bound1, bound1)
    b_in = jax.random.uniform(kb1, (hidden_dim,), jnp.float32, -bound1, bound1)
    bound2 = 1.0 / (hidden_dim ** 0.5)
    w_out = jax.random.uniform(kw2, (hidden_dim, output_size), jnp.float32, -bound2, bound2)
    b_out = jax.random.uniform(kb2, (output_size,), jnp.float32, -bound2, bound2)

    ref = jnp.tanh(x @ w_in + b_in) @ w_out + b_out

    # 1) Default path: f32 MXU inputs, module-exact semantics, no padding.
    out = jax.block_until_ready(mlp_forward(x, w_in, b_in, w_out, b_out))
    assert out.shape == (batch, output_size)
    err = float(jnp.max(jnp.abs(out - ref)))
    assert jnp.allclose(out, ref, atol=1e-2, rtol=1e-2), f"f32 path max abs err {err}"

    # 2) Explicit bf16-MXU path (documented precision trade-off for large shapes).
    out_bf16 = jax.block_until_ready(
        mlp_forward(x, w_in, b_in, w_out, b_out, use_bf16_matmul=True))
    assert jnp.allclose(out_bf16, ref, atol=5e-2, rtol=5e-2)

    # 3) K-tiled fallback (hidden split across the reduction axis) + a ragged,
    #    multi-tile batch to exercise the 2-axis accumulator pipeline.
    B2, H2 = 72, 256
    kx2, kw3, kb3, kw4, kb4 = jax.random.split(jax.random.PRNGKey(1), 5)
    x2 = jax.random.normal(kx2, (B2, input_size), dtype=jnp.float32)
    w_in2 = jax.random.uniform(kw3, (input_size, H2), jnp.float32, -bound1, bound1)
    b_in2 = jax.random.uniform(kb3, (H2,), jnp.float32, -bound1, bound1)
    bound3 = 1.0 / (H2 ** 0.5)
    w_out2 = jax.random.uniform(kw4, (H2, output_size), jnp.float32, -bound3, bound3)
    b_out2 = jax.random.uniform(kb4, (output_size,), jnp.float32, -bound3, bound3)
    ref2 = jnp.tanh(x2 @ w_in2 + b_in2) @ w_out2 + b_out2
    out2 = jax.block_until_ready(
        mlp_forward(x2, w_in2, b_in2, w_out2, b_out2, hidden_tile=128))
    assert out2.shape == (B2, output_size)
    err2 = float(jnp.max(jnp.abs(out2 - ref2)))
    assert jnp.allclose(out2, ref2, atol=1e-2, rtol=1e-2), f"k-tiled max abs err {err2}"

    print("KERNEL_OK")
</pallas_src>

<mosaic_0001>
module attributes {stable_mosaic.version = 11 : i64} {
  func.func @_mlp_kernel(%arg0: i32, %arg1: i32, %arg2: memref<8x32xf32, #tpu.memory_space<vmem>>, %arg3: memref<32x64xf32, #tpu.memory_space<vmem>>, %arg4: memref<1x64xf32, #tpu.memory_space<vmem>>, %arg5: memref<64x16xf32, #tpu.memory_space<vmem>>, %arg6: memref<1x16xf32, #tpu.memory_space<vmem>>, %arg7: memref<8x16xf32, #tpu.memory_space<vmem>>) attributes {dimension_semantics = [#tpu.dimension_semantics<parallel>, #tpu.dimension_semantics<arbitrary>], iteration_bounds = array<i64: 1, 1>, scalar_prefetch = 0 : i64, scratch_operands = 0 : i64, tpu.core_type = #tpu.core_type<tc>, window_params = [{transform_indices = @transform_0, window_bounds = array<i64: 8, 32>}, {transform_indices = @transform_1, window_bounds = array<i64: 32, 64>}, {transform_indices = @transform_2, window_bounds = array<i64: 1, 64>}, {transform_indices = @transform_3, window_bounds = array<i64: 64, 16>}, {pipeline_mode = #tpu.pipeline_mode<synchronous>, transform_indices = @transform_4, window_bounds = array<i64: 1, 16>}, {transform_indices = @transform_5, window_bounds = array<i64: 8, 16>}]} {
    %c0_i32 = arith.constant 0 : i32
    %0 = arith.cmpi eq, %arg1, %c0_i32 : i32
    %1 = arith.extui %0 : i1 to i32
    %c0_i32_0 = arith.constant 0 : i32
    %2 = arith.cmpi ne, %1, %c0_i32_0 : i32
    scf.if %2 {
      %cst_15 = arith.constant 0.000000e+00 : f32
      %18 = vector.broadcast %cst_15 : f32 to vector<8x16xf32>
      %c0_16 = arith.constant 0 : index
      %c0_17 = arith.constant 0 : index
      %19 = vector.load %arg7[%c0_16, %c0_17] : memref<8x16xf32, #tpu.memory_space<vmem>>, vector<8x16xf32>
      tpu.vector_store %arg7[%c0_16, %c0_17], %18 {strides = array<i32>} : memref<8x16xf32, #tpu.memory_space<vmem>>, vector<8x16xf32>,
    } else {
    }
    %c0 = arith.constant 0 : index
    %c0_1 = arith.constant 0 : index
    %3 = vector.load %arg2[%c0, %c0_1] : memref<8x32xf32, #tpu.memory_space<vmem>>, vector<8x32xf32>
    %c0_2 = arith.constant 0 : index
    %c0_3 = arith.constant 0 : index
    %4 = vector.load %arg3[%c0_2, %c0_3] : memref<32x64xf32, #tpu.memory_space<vmem>>, vector<32x64xf32>
    %cst = arith.constant dense<0.000000e+00> : vector<8x64xf32>
    %5 = tpu.matmul %3, %4, %cst {dimension_numbers = #tpu.dot_dimension_numbers<[1], [0], [0], [1], [0, 0, 1, 1], [], []>} : vector<8x32xf32>, vector<32x64xf32>, vector<8x64xf32> -> vector<8x64xf32>
    %c0_4 = arith.constant 0 : index
    %c0_5 = arith.constant 0 : index
    %6 = vector.load %arg4[%c0_4, %c0_5] : memref<1x64xf32, #tpu.memory_space<vmem>>, vector<1x64xf32>
    %7 = vector.broadcast %6 : vector<1x64xf32> to vector<8x64xf32>
    %8 = arith.addf %5, %7 : vector<8x64xf32>
    %9 = math.tanh %8 : vector<8x64xf32>
    %c0_6 = arith.constant 0 : index
    %c0_7 = arith.constant 0 : index
    %10 = vector.load %arg7[%c0_6, %c0_7] : memref<8x16xf32, #tpu.memory_space<vmem>>, vector<8x16xf32>
    %c0_8 = arith.constant 0 : index
    %c0_9 = arith.constant 0 : index
    %11 = vector.load %arg5[%c0_8, %c0_9] : memref<64x16xf32, #tpu.memory_space<vmem>>, vector<64x16xf32>
    %cst_10 = arith.constant dense<0.000000e+00> : vector<8x16xf32>
    %12 = tpu.matmul %9, %11, %cst_10 {dimension_numbers = #tpu.dot_dimension_numbers<[1], [0], [0], [1], [0, 0, 1, 1], [], []>} : vector<8x64xf32>, vector<64x16xf32>, vector<8x16xf32> -> vector<8x16xf32>
    %13 = arith.addf %10, %12 : vector<8x16xf32>
    %c0_11 = arith.constant 0 : index
    %c0_12 = arith.constant 0 : index
    %14 = vector.load %arg7[%c0_11, %c0_12] : memref<8x16xf32, #tpu.memory_space<vmem>>, vector<8x16xf32>
    tpu.vector_store %arg7[%c0_11, %c0_12], %13 {strides = array<i32>} : memref<8x16xf32, #tpu.memory_space<vmem>>, vector<8x16xf32>,
    %c0_i32_13 = arith.constant 0 : i32
    %15 = arith.cmpi eq, %arg1, %c0_i32_13 : i32
    %16 = arith.extui %15 : i1 to i32
    %c0_i32_14 = arith.constant 0 : i32
    %17 = arith.cmpi ne, %16, %c0_i32_14 : i32
    scf.if %17 {
      %c0_15 = arith.constant 0 : index
      %c0_16 = arith.constant 0 : index
      %18 = vector.load %arg7[%c0_15, %c0_16] : memref<8x16xf32, #tpu.memory_space<vmem>>, vector<8x16xf32>
      %c0_17 = arith.constant 0 : index
      %c0_18 = arith.constant 0 : index
      %19 = vector.load %arg6[%c0_17, %c0_18] : memref<1x16xf32, #tpu.memory_space<vmem>>, vector<1x16xf32>
      %20 = vector.broadcast %19 : vector<1x16xf32> to vector<8x16xf32>
      %21 = arith.addf %18, %20 : vector<8x16xf32>
      %c0_19 = arith.constant 0 : index
      %c0_20 = arith.constant 0 : index
      %22 = vector.load %arg7[%c0_19, %c0_20] : memref<8x16xf32, #tpu.memory_space<vmem>>, vector<8x16xf32>
      tpu.vector_store %arg7[%c0_19, %c0_20], %21 {strides = array<i32>} : memref<8x16xf32, #tpu.memory_space<vmem>>, vector<8x16xf32>,
    } else {
    }
    return
  }
  func.func @transform_0(%arg0: i32, %arg1: i32) -> (i32, i32) {
    %c0_i32 = arith.constant 0 : i32
    %c0_i32_0 = arith.constant 0 : i32
    return %arg0, %c0_i32 : i32, i32
  }
  func.func @transform_1(%arg0: i32, %arg1: i32) -> (i32, i32) {
    %c0_i32 = arith.constant 0 : i32
    %c0_i32_0 = arith.constant 0 : i32
    return %c0_i32, %arg1 : i32, i32
  }
  func.func @transform_2(%arg0: i32, %arg1: i32) -> (i32, i32) {
    %c0_i32 = arith.constant 0 : i32
    %c0_i32_0 = arith.constant 0 : i32
    return %c0_i32, %arg1 : i32, i32
  }
  func.func @transform_3(%arg0: i32, %arg1: i32) -> (i32, i32) {
    %c0_i32 = arith.constant 0 : i32
    %c0_i32_0 = arith.constant 0 : i32
    return %arg1, %c0_i32 : i32, i32
  }
  func.func @transform_4(%arg0: i32, %arg1: i32) -> (i32, i32) {
    %c0_i32 = arith.constant 0 : i32
    %c0_i32_0 = arith.constant 0 : i32
    %c0_i32_1 = arith.constant 0 : i32
    return %c0_i32, %c0_i32_0 : i32, i32
  }
  func.func @transform_5(%arg0: i32, %arg1: i32) -> (i32, i32) {
    %c0_i32 = arith.constant 0 : i32
    %c0_i32_0 = arith.constant 0 : i32
    return %arg0, %c0_i32 : i32, i32
  }
}

</mosaic_0001>

<llo_original>
// kernel: tpu_custom_call.1
$region0: #{tpu_custom_call.1}
  #allocation0 [shape = 'u32[]', space=smem, size = 0x4, offset = 0x4, fixed_abs, tag = 'smem constant byte address 0x4 - core index']
  #allocation1 [shape = 'u32[144,128]{1,0:T(1,128)}', space=vmem, size = 0x12000, scoped, tag = 'internal scratch']
  %s0 = inlined_call_operand.vmem [shape: f32[8,32], index: 0, kind: input, shape index: {}]
  %s1 = inlined_call_operand.vmem [shape: f32[32,64], index: 1, kind: input, shape index: {}]
  %s2 = inlined_call_operand.vmem [shape: f32[1,64], index: 2, kind: input, shape index: {}]
  %s3 = inlined_call_operand.vmem [shape: f32[64,16], index: 3, kind: input, shape index: {}]
  %s4 = inlined_call_operand.vmem [shape: f32[1,16], index: 4, kind: input, shape index: {}]
  %s5 = inlined_call_operand.hbm [shape: f32[8,16], index: 5, kind: output, shape index: {}]
  %s6 = sld [smem:[#allocation0]]
  $region38: #{tpu_custom_call.1} parent=0
    _
  %s8 = ssub.s32 1, %s6
  %s9 = scalar_select 0, %s8, %s6
  $region1: #{tpu_custom_call.1} parent=0
    #allocation2 [shape = 'u8[4096]{0}', space=vmem, size = 0x1000, scoped, tag = 'output window, operand 0, single buffered']
    #allocation3 [shape = 's32[1]{0}', space=sflag, size = 0x4, scoped, tag = 'scoped memory for tpu_custom_call.1']
    %10 = vsyncpa [#allocation3], 0
    // Predicated region
    $region2: #{tpu_custom_call.1} parent=1 // pred_check
      _
    $region3: #{tpu_custom_call.1} parent=1 // pred_check_branch
      %12 = sbr.rel (0) target = $region5
    $region4: #{tpu_custom_call.1} parent=1 // pred_region
      _
    $region5: #{tpu_custom_call.1} parent=1 // pred_fallthru
      _
    // Predicated region
    $region6: #{tpu_custom_call.1} parent=1 // pred_check
      _
    $region7: #{tpu_custom_call.1} parent=1 // pred_check_branch
      %14 = sbr.rel (0) target = $region9
    $region8: #{tpu_custom_call.1} parent=1 // pred_region
      _
    $region9: #{tpu_custom_call.1} parent=1 // pred_fallthru
      _
    // Predicated region
    $region10: #{tpu_custom_call.1} parent=1 // pred_check
      _
    $region11: #{tpu_custom_call.1} parent=1 // pred_check_branch
      %16 = sbr.rel (0) target = $region13
    $region12: #{tpu_custom_call.1} parent=1 // pred_region
      _
    $region13: #{tpu_custom_call.1} parent=1 // pred_fallthru
      _
    // Predicated region
    $region14: #{tpu_custom_call.1} parent=1 // pred_check
      _
    $region15: #{tpu_custom_call.1} parent=1 // pred_check_branch
      %18 = sbr.rel (0) target = $region17
    $region16: #{tpu_custom_call.1} parent=1 // pred_region
      _
    $region17: #{tpu_custom_call.1} parent=1 // pred_fallthru
      _
    // Predicated region
    $region18: #{tpu_custom_call.1} parent=1 // pred_check
      _
    $region19: #{tpu_custom_call.1} parent=1 // pred_check_branch
      %20 = sbr.rel (0) target = $region21
    $region20: #{tpu_custom_call.1} parent=1 // pred_region
      _
    $region21: #{tpu_custom_call.1} parent=1 // pred_fallthru
      _
    %p21 = scmp.eq.s32.totalorder 0, 0
    // Predicated region
    $region22: #{tpu_custom_call.1} parent=1 // pred_check
      %p22 = pneg %p21
    $region23: #{tpu_custom_call.1} parent=1 // pred_check_branch
      %24 = sbr.rel (%p22) target = $region25
    $region24: #{tpu_custom_call.1} parent=1 // pred_region
      %vm25 = vcmask 130048
      %26 = vst.msk [vmem:[#allocation2] sm:$0xff] %vm25, 0.0
    $region25: #{tpu_custom_call.1} parent=1 // pred_fallthru
      _
    %v27 = vld [vmem:[%s0] sm:$0xff]
    %v28 = vld [vmem:[%s1] sm:$0xff]
    %v29 = vld [vmem:[%s1 + $0x8] sm:$0xff]
    %v30 = vld [vmem:[%s1 + $0x10] sm:$0xff]
    %v31 = vld [vmem:[%s1 + $0x18] sm:$0xff]
    %v32 = vld [vmem:[%s2] sm:$0x1]
    %v34 = vlaneseq
    %v35 = vshrl.u32 %v34, 7
    %v36 = vsub.s32 0, %v35
    %v37 = vrot.slane %v32, %v36
    %vm39 = vcmask 261120
    %v41 = vsel %vm39, %v27, 0
    %43 = vmatprep.subr.mxu0 0.0
    %44 = vmatpush1.msra.mxu0 %v28
    %45 = vmatprep.subr.mxu0 0.0
    %46 = vmatpush1.msra.mxu0 %v29
    %47 = vmatprep.subr.mxu0 0.0
    %48 = vmatpush1.msra.mxu0 %v30
    %49 = vmatprep.subr.mxu0 0.0
    %50 = vmatpush1.msra.mxu0 %v31
    %51 = vmatprep.subr.mxu0 0.0
    %52 = vmatpush1.msra.mxu0 0.0
    %53 = vmatprep.subr.mxu0 0.0
    %54 = vmatpush1.msra.mxu0 0.0
    %55 = vmatprep.subr.mxu0 0.0
    %56 = vmatpush1.msra.mxu0 0.0
    %57 = vmatprep.subr.mxu0 0.0
    %58 = vmatpush1.msra.mxu0 0.0
    %59 = vmatprep.subr.mxu0 0.0
    %60 = vmatpush1.msra.mxu0 0.0
    %61 = vmatprep.subr.mxu0 0.0
    %62 = vmatpush1.msra.mxu0 0.0
    %63 = vmatprep.subr.mxu0 0.0
    %64 = vmatpush1.msra.mxu0 0.0
    %65 = vmatprep.subr.mxu0 0.0
    %66 = vmatpush1.msra.mxu0 0.0
    %67 = vmatprep.subr.mxu0 0.0
    %68 = vmatpush1.msra.mxu0 0.0
    %69 = vmatprep.subr.mxu0 0.0
    %70 = vmatpush1.msra.mxu0 0.0
    %71 = vmatprep.subr.mxu0 0.0
    %72 = vmatpush1.msra.mxu0 0.0
    %73 = vmatprep.subr.mxu0 0.0
    %74 = vmatpush1.msra.mxu0 0.0
    %75 = vmatprep.subr.mxu0 0.0
    %76 = vmatpush1.msra.mxu0 0.0
    %77 = vmatprep.subr.mxu0 0.0
    %78 = vmatpush1.msra.mxu0 0.0
    %79 = vmatprep.subr.mxu0 0.0
    %80 = vmatpush1.msra.mxu0 0.0
    %81 = vmatprep.subr.mxu0 0.0
    %82 = vmatpush1.msra.mxu0 0.0
    %83 = vmatprep.subr.mxu0 0.0
    %84 = vmatpush1.msra.mxu0 0.0
    %85 = vmatprep.subr.mxu0 0.0
    %86 = vmatpush1.msra.mxu0 0.0
    %87 = vmatprep.subr.mxu0 0.0
    %88 = vmatpush1.msra.mxu0 0.0
    %89 = vmatprep.subr.mxu0 0.0
    %90 = vmatpush1.msra.mxu0 0.0
    %91 = vmatprep.subr.mxu0 0.0
    %92 = vmatpush1.msra.mxu0 0.0
    %93 = vmatprep.subr.mxu0 0.0
    %94 = vmatpush1.msra.mxu0 0.0
    %95 = vmatprep.subr.mxu0 0.0
    %96 = vmatpush1.msra.mxu0 0.0
    %97 = vmatprep.subr.mxu0 0.0
    %98 = vmatpush1.msra.mxu0 0.0
    %99 = vmatprep.subr.mxu0 0.0
    %100 = vmatpush1.msra.mxu0 0.0
    %101 = vmatprep.subr.mxu0 0.0
    %102 = vmatpush1.msra.mxu0 0.0
    %103 = vmatprep.subr.mxu0 0.0
    %104 = vmatpush1.msra.mxu0 0.0
    %105 = vmatprep.subr.mxu0 0.0
    %106 = vmatpush1.msra.mxu0 0.0
    %107 = vmatprep.mubr.f32.mxu0 0.0
    %108 = vmatmul.mubr.f32.gmra.mrb[0].mxu0 %v41
    %v109 = vpop.f32.mrb[0].mxu0
    %v110 = vadd.f32 %v37, %v109
    %v111 = vpop.f32.mrb[0].mxu0
    %112 = vdwg.mxu0
    %v113 = vtanh.pop %v110
    %v114 = vld [vmem:[#allocation2] sm:$0xff]
    %v115 = vld [vmem:[%s3] sm:$0xff]
    %v116 = vld [vmem:[%s3 + $0x8] sm:$0xff]
    %v117 = vld [vmem:[%s3 + $0x10] sm:$0xff]
    %v118 = vld [vmem:[%s3 + $0x18] sm:$0xff]
    %v119 = vld [vmem:[%s3 + $0x20] sm:$0xff]
    %v120 = vld [vmem:[%s3 + $0x28] sm:$0xff]
    %v121 = vld [vmem:[%s3 + $0x30] sm:$0xff]
    %v122 = vld [vmem:[%s3 + $0x38] sm:$0xff]
    %vm123 = vcmask 523264
    %v125 = vsel %vm123, %v113, 0
    %127 = vmatprep.subr.mxu0 0.0
    %128 = vmatpush1.msra.mxu0 %v115
    %129 = vmatprep.subr.mxu0 0.0
    %130 = vmatpush1.msra.mxu0 %v116
    %131 = vmatprep.subr.mxu0 0.0
    %132 = vmatpush1.msra.mxu0 %v117
    %133 = vmatprep.subr.mxu0 0.0
    %134 = vmatpush1.msra.mxu0 %v118
    %135 = vmatprep.subr.mxu0 0.0
    %136 = vmatpush1.msra.mxu0 %v119
    %137 = vmatprep.subr.mxu0 0.0
    %138 = vmatpush1.msra.mxu0 %v120
    %139 = vmatprep.subr.mxu0 0.0
    %140 = vmatpush1.msra.mxu0 %v121
    %141 = vmatprep.subr.mxu0 0.0
    %142 = vmatpush1.msra.mxu0 %v122
    %143 = vmatprep.subr.mxu0 0.0
    %144 = vmatpush1.msra.mxu0 0.0
    %145 = vmatprep.subr.mxu0 0.0
    %146 = vmatpush1.msra.mxu0 0.0
    %147 = vmatprep.subr.mxu0 0.0
    %148 = vmatpush1.msra.mxu0 0.0
    %149 = vmatprep.subr.mxu0 0.0
    %150 = vmatpush1.msra.mxu0 0.0
    %151 = vmatprep.subr.mxu0 0.0
    %152 = vmatpush1.msra.mxu0 0.0
    %153 = vmatprep.subr.mxu0 0.0
    %154 = vmatpush1.msra.mxu0 0.0
    %155 = vmatprep.subr.mxu0 0.0
    %156 = vmatpush1.msra.mxu0 0.0
    %157 = vmatprep.subr.mxu0 0.0
    %158 = vmatpush1.msra.mxu0 0.0
    %159 = vmatprep.subr.mxu0 0.0
    %160 = vmatpush1.msra.mxu0 0.0
    %161 = vmatprep.subr.mxu0 0.0
    %162 = vmatpush1.msra.mxu0 0.0
    %163 = vmatprep.subr.mxu0 0.0
    %164 = vmatpush1.msra.mxu0 0.0
    %165 = vmatprep.subr.mxu0 0.0
    %166 = vmatpush1.msra.mxu0 0.0
    %167 = vmatprep.subr.mxu0 0.0
    %168 = vmatpush1.msra.mxu0 0.0
    %169 = vmatprep.subr.mxu0 0.0
    %170 = vmatpush1.msra.mxu0 0.0
    %171 = vmatprep.subr.mxu0 0.0
    %172 = vmatpush1.msra.mxu0 0.0
    %173 = vmatprep.subr.mxu0 0.0
    %174 = vmatpush1.msra.mxu0 0.0
    %175 = vmatprep.subr.mxu0 0.0
    %176 = vmatpush1.msra.mxu0 0.0
    %177 = vmatprep.subr.mxu0 0.0
    %178 = vmatpush1.msra.mxu0 0.0
    %179 = vmatprep.subr.mxu0 0.0
    %180 = vmatpush1.msra.mxu0 0.0
    %181 = vmatprep.subr.mxu0 0.0
    %182 = vmatpush1.msra.mxu0 0.0
    %183 = vmatprep.subr.mxu0 0.0
    %184 = vmatpush1.msra.mxu0 0.0
    %185 = vmatprep.subr.mxu0 0.0
    %186 = vmatpush1.msra.mxu0 0.0
    %187 = vmatprep.subr.mxu0 0.0
    %188 = vmatpush1.msra.mxu0 0.0
    %189 = vmatprep.subr.mxu0 0.0
    %190 = vmatpush1.msra.mxu0 0.0
    %191 = vmatprep.mubr.f32.mxu0 0.0
    %192 = vmatmul.mubr.f32.gmra.mrb[0].mxu0 %v125
    %v193 = vpop.f32.mrb[0].mxu0
    %v194 = vadd.f32 0.0, %v193
    %v195 = vpop.f32.mrb[0].mxu0
    %196 = vdwg.mxu0
    %v197 = vadd.f32 %v114, %v194
    %vm198 = vcmask 130048
    %199 = vst.msk [vmem:[#allocation2] sm:$0xff] %vm198, %v197
    // Predicated region
    $region26: #{tpu_custom_call.1} parent=1 // pred_check
      %p200 = pneg %p21
    $region27: #{tpu_custom_call.1} parent=1 // pred_check_branch
      %202 = sbr.rel (%p200) target = $region29
    $region28: #{tpu_custom_call.1} parent=1 // pred_region
      %v203 = vld [vmem:[#allocation2] sm:$0xff]
      %v204 = vld [vmem:[%s4] sm:$0x1]
      %v206 = vlaneseq
      %v207 = vshrl.u32 %v206, 7
      %v208 = vsub.s32 0, %v207
      %v209 = vrot.slane %v204, %v208
      %v211 = vadd.f32 %v203, %v209
      %212 = vst.msk [vmem:[#allocation2] sm:$0xff] %vm198, %v211
    $region29: #{tpu_custom_call.1} parent=1 // pred_fallthru
      _
    // Predicated region
    $region30: #{tpu_custom_call.1} parent=1 // pred_check
      _
    $region31: #{tpu_custom_call.1} parent=1 // pred_check_branch
      %214 = sbr.rel (0) target = $region33
    $region32: #{tpu_custom_call.1} parent=1 // pred_region
      %s216 = ssub.s32 128, 128
      %217 = vsyncadd [#allocation3], %s216
      %s219 = sshll.u32 [#allocation2], 4
      %s220 = int_to_ptr.vmem [resolvable:$true] %s219
      %222 = dma.vmem_to_hbm [thread:$0]  %s220, 128, %s5, [#allocation3]
    $region33: #{tpu_custom_call.1} parent=1 // pred_fallthru
      _
    // Predicated region
    $region34: #{tpu_custom_call.1} parent=1 // pred_check
      _
    $region35: #{tpu_custom_call.1} parent=1 // pred_check_branch
      %224 = sbr.rel (0) target = $region37
    $region36: #{tpu_custom_call.1} parent=1 // pred_region
      %225 = dma.done [#allocation3], 128
    $region37: #{tpu_custom_call.1} parent=1 // pred_fallthru
      _
    %226 = vsyncpa [#allocation3], 1

</llo_original>
